<compile_context>
chip_gen: v5e
topology: v5e:2x2
jax: 0.10.0
libtpu: 0.0.40
codegen_flags: <defaults>
</compile_context>

<pallas_src>
import functools

import jax
import jax.numpy as jnp
from jax import lax
from jax.experimental import pallas as pl
from jax.experimental.pallas import tpu as pltpu


def _resblock_kernel(*refs, nb, h, wcin, wcout, has_projection):
    """Fused residual block on a (nb, h, W*C) lane-dense batch block.

    refs (projection):  x, w1_band, w2_band, wsc_band, bias1, bias2, out
    refs (identity)  :  x, w1_band, w2_band,            bias1, bias2, out

    x_ref   : (nb, h, wcin)        input block, lane axis = W*Cin   (f32)
    w1_ref  : (3, wcin, wcout)     conv1 band matrices (BN1 scale folded in)
    w2_ref  : (3, wcout, wcout)    conv2 band matrices (BN2 scale folded in)
    wsc_ref : (wcin, wcout)        block-diag 1x1 shortcut (BN_sc scale folded)
    b*_ref  : (1, wcout)           per-channel biases tiled over W   (f32)
    o_ref   : (nb, h, wcout)       output block, lane axis = W*Cout
    """
    if has_projection:
        x_ref, w1_ref, w2_ref, wsc_ref, b1_ref, b2_ref, o_ref = refs
    else:
        x_ref, w1_ref, w2_ref, b1_ref, b2_ref, o_ref = refs

    m = nb * h
    mm_dtype = w1_ref.dtype                       # matmul operand dtype (bf16 or f32)

    x = x_ref[...].reshape(m, wcin)               # (M, W*Cin), f32
    x_mm = x.astype(mm_dtype)

    # Halo masks, built ONCE as (M, 1) and reused by both convs: within-image
    # row index -> keep-all-but-first-row / keep-all-but-last-row masks.
    gi = lax.broadcasted_iota(jnp.int32, (m, 1), 0)
    if nb == 1:
        row = gi
    elif (h & (h - 1)) == 0:                      # h power of two
        row = jnp.bitwise_and(gi, h - 1)
    else:
        row = lax.rem(gi, h)
    mask_top = row >= 1                           # zero the kh=0 term on row 0
    mask_bot = row <= h - 2                       # zero the kh=2 term on row h-1

    def conv3x3(inp, w_ref):
        # One MXU matmul per kernel row kh; kw and ci are fused into the band.
        p0 = jnp.dot(inp, w_ref[0], preferred_element_type=jnp.float32)
        p1 = jnp.dot(inp, w_ref[1], preferred_element_type=jnp.float32)
        p2 = jnp.dot(inp, w_ref[2], preferred_element_type=jnp.float32)
        # H-direction zero padding: shift p0 down by one row / p2 up by one row
        # (static cyclic sublane rotate; equivalently pltpu.roll with the
        # non-negative shifts 1 and m-1) and mask the image-boundary rows.
        up = jnp.where(mask_top, jnp.roll(p0, 1, axis=0), 0.0)
        dn = jnp.where(mask_bot, jnp.roll(p2, -1, axis=0), 0.0)
        return p1 + up + dn

    # conv1 + BN1 (scale folded into weights, bias here) + ReLU   -- f32 path
    h1 = jnp.maximum(conv3x3(x_mm, w1_ref) + b1_ref[...], 0.0)
    # conv2 (BN2 scale folded into weights)
    left = conv3x3(h1.astype(mm_dtype), w2_ref)

    # shortcut: projection = one block-diagonal matmul; identity = direct add
    if has_projection:
        sc = jnp.dot(x_mm, wsc_ref[...], preferred_element_type=jnp.float32)
    else:
        sc = x

    # residual add + merged (BN2 + BN_sc) bias + ReLU; dropout = identity (eval)
    out = jnp.maximum(left + sc + b2_ref[...], 0.0)
    o_ref[...] = out.reshape(nb, h, wcout).astype(o_ref.dtype)


def _band_weights(w_hwio, scale, width):
    """Fold the BN scale into HWIO conv weights and build per-kh band matrices.

    Returns (3, width*Cin, width*Cout): band[kh] maps a lane-dense input row
    (W*Cin lanes) to a lane-dense output row (W*Cout lanes); W-direction zero
    padding is encoded by the band truncation.
    """
    w = w_hwio * scale                                    # fold BN scale (per Cout)
    bands = []
    for kh in range(3):
        b = sum(jnp.kron(jnp.eye(width, k=1 - kw, dtype=w.dtype), w[kh, kw])
                for kw in range(3))
        bands.append(b)
    return jnp.stack(bands, axis=0)


def residual_block_pallas(x_nhwc, params, *, block_n=None,
                          matmul_dtype=jnp.bfloat16, out_dtype=None,
                          min_grid_steps=2):
    """Fused ResidualBlock forward (inference). x_nhwc: (N, H, W, Cin) float32.

    Returns (N, H, W, Cout).  NHWC <-> the kernel's lane-dense (N, H, W*C) view
    is a free reshape, so no HBM transpose is paid on either side.  Set
    out_dtype=jnp.bfloat16 to halve output DMA bytes when downstream layers
    accept bf16.
    """
    N, H, W, Cin = x_nhwc.shape
    Cout = params["w1"].shape[-1]
    has_projection = "wsc" in params
    if out_dtype is None:
        out_dtype = x_nhwc.dtype
    wcin, wcout = W * Cin, W * Cout

    x_lanes = x_nhwc.reshape(N, H, wcin)          # lane axis = W*Cin (dense)

    # ---- trace-time weight prep: BN folding + im2col band matrices ---------
    w1b = _band_weights(params["w1"], params["s1"], W).astype(matmul_dtype)
    w2b = _band_weights(params["w2"], params["s2"], W).astype(matmul_dtype)
    bias1 = jnp.tile(params["b1"], W).reshape(1, wcout).astype(jnp.float32)
    bias2_c = params["b2"]

    args = [x_lanes, w1b, w2b]
    weight_bytes = (w1b.size * w1b.dtype.itemsize + w2b.size * w2b.dtype.itemsize)
    wscb = None
    if has_projection:
        wscb = jnp.kron(jnp.eye(W, dtype=jnp.float32),
                        params["wsc"] * params["ssc"]).astype(matmul_dtype)
        bias2_c = bias2_c + params["bsc"]                 # merge BN biases
        args.append(wscb)
        weight_bytes += wscb.size * wscb.dtype.itemsize
    bias2 = jnp.tile(bias2_c, W).reshape(1, wcout).astype(jnp.float32)
    args += [bias1, bias2]

    # ---- batch blocking ------------------------------------------------------
    in_isz = jnp.dtype(x_lanes.dtype).itemsize
    out_isz = jnp.dtype(out_dtype).itemsize

    def vmem_bytes(bn):
        m = bn * H
        tiles = 2 * m * (wcin * in_isz + wcout * out_isz)     # double-buffered in/out
        interm = 6 * m * wcout * 4                            # p0/p1/p2, h1, left, sc (f32)
        return tiles + interm + weight_bytes + (2 << 20)      # + slack

    if block_n is None:
        # Target matmul M = block_n*H around 512 rows, but keep >= min_grid_steps
        # grid steps so both v7x TensorCores get work, and stay under a
        # conservative VMEM budget (v7x has 64 MiB/TC).
        block_n = max(1, min(N, max(1, 512 // H)))
        block_n = min(block_n, max(1, pl.cdiv(N, max(1, min_grid_steps))))
        while block_n > 1 and vmem_bytes(block_n) > (40 << 20):
            block_n = max(1, block_n // 2)
    else:
        block_n = max(1, min(block_n, N))

    # Ragged N: cdiv grid; the padded tail block's garbage rows never feed valid
    # outputs (per-image row masks + row-independent matmuls) and its OOB output
    # rows are dropped.
    grid = (pl.cdiv(N, block_n),)
    vmem_limit = int(min(100 << 20, max(32 << 20, int(vmem_bytes(block_n) * 1.5))))

    def _full_spec(a):
        nd = a.ndim
        return pl.BlockSpec(a.shape, lambda n, _nd=nd: (0,) * _nd)

    # Weights/biases: constant index_map full-array blocks -> DMA'd once, kept
    # resident across the whole grid.
    in_specs = [pl.BlockSpec((block_n, H, wcin), lambda n: (n, 0, 0)),
                _full_spec(w1b), _full_spec(w2b)]
    if has_projection:
        in_specs.append(_full_spec(wscb))
    in_specs += [_full_spec(bias1), _full_spec(bias2)]

    kern = functools.partial(_resblock_kernel, nb=block_n, h=H,
                             wcin=wcin, wcout=wcout,
                             has_projection=has_projection)

    out = pl.pallas_call(
        kern,
        out_shape=jax.ShapeDtypeStruct((N, H, wcout), out_dtype),
        grid=grid,
        in_specs=in_specs,
        out_specs=pl.BlockSpec((block_n, H, wcout), lambda n: (n, 0, 0)),
        compiler_params=pltpu.CompilerParams(
            dimension_semantics=("parallel",),
            vmem_limit_bytes=vmem_limit),
    )(*args)

    return out.reshape(N, H, W, Cout)


def residual_block_pallas_nchw(x_nchw, params, **kw):
    """PyTorch-layout (NCHW) convenience wrapper.

    The two transposes roughly double HBM traffic for this memory-bound kernel;
    prefer keeping the surrounding model NHWC and calling residual_block_pallas.
    """
    x_nhwc = jnp.transpose(x_nchw, (0, 2, 3, 1))
    out = residual_block_pallas(x_nhwc, params, **kw)
    return jnp.transpose(out, (0, 3, 1, 2))


def _fold_bn(gamma, beta, mean, var, eps=1e-5):
    scale = gamma / jnp.sqrt(var + eps)
    return scale, beta - mean * scale


def make_params(key, in_channels, out_channels):
    ks = jax.random.split(key, 8)
    w1 = 0.1 * jax.random.normal(ks[0], (3, 3, in_channels, out_channels), jnp.float32)
    w2 = 0.1 * jax.random.normal(ks[1], (3, 3, out_channels, out_channels), jnp.float32)
    g1 = 1.0 + 0.1 * jax.random.normal(ks[2], (out_channels,), jnp.float32)
    be1 = 0.05 * jax.random.normal(ks[3], (out_channels,), jnp.float32)
    m1 = 0.1 * jax.random.normal(ks[4], (out_channels,), jnp.float32)
    v1 = 0.5 + jax.random.uniform(ks[5], (out_channels,), jnp.float32)
    g2 = 1.0 + 0.1 * jax.random.normal(ks[6], (out_channels,), jnp.float32)
    be2 = 0.05 * jax.random.normal(ks[7], (out_channels,), jnp.float32)
    m2 = jnp.linspace(-0.1, 0.1, out_channels, dtype=jnp.float32)
    v2 = jnp.linspace(0.8, 1.2, out_channels, dtype=jnp.float32)
    s1, b1 = _fold_bn(g1, be1, m1, v1)
    s2, b2 = _fold_bn(g2, be2, m2, v2)
    p = dict(w1=w1, s1=s1, b1=b1, w2=w2, s2=s2, b2=b2)
    if in_channels != out_channels:   # projection shortcut (1x1 conv + BN)
        wsc = 0.1 * jax.random.normal(jax.random.PRNGKey(42),
                                      (in_channels, out_channels), jnp.float32)
        gsc = 1.0 + jnp.linspace(-0.05, 0.05, out_channels, dtype=jnp.float32)
        bsc = jnp.linspace(-0.02, 0.02, out_channels, dtype=jnp.float32)
        ssc, bbsc = _fold_bn(gsc, bsc, jnp.zeros((out_channels,), jnp.float32),
                             jnp.ones((out_channels,), jnp.float32))
        p.update(wsc=wsc, ssc=ssc, bsc=bbsc)
    return p


def residual_block_reference(x_nhwc, p):
    """Pure-JAX reference (inference semantics, NHWC), for verification only."""
    dn = ("NHWC", "HWIO", "NHWC")
    y = lax.conv_general_dilated(x_nhwc, p["w1"], (1, 1), [(1, 1), (1, 1)],
                                 dimension_numbers=dn)
    y = jnp.maximum(y * p["s1"] + p["b1"], 0.0)
    y = lax.conv_general_dilated(y, p["w2"], (1, 1), [(1, 1), (1, 1)],
                                 dimension_numbers=dn)
    y = y * p["s2"] + p["b2"]
    if "wsc" in p:
        sc = jnp.einsum("nhwc,co->nhwo", x_nhwc, p["wsc"]) * p["ssc"] + p["bsc"]
    else:
        sc = x_nhwc
    return jnp.maximum(y + sc, 0.0)


if __name__ == "__main__":
    key = jax.random.PRNGKey(0)
    k_x, k_p, k_x2, k_p2 = jax.random.split(key, 4)

    # 1) projection-shortcut block (Cin != Cout), f32 matmul path: tight check
    N, Cin, Cout, H, W = 2, 4, 8, 16, 16
    x = jax.random.normal(k_x, (N, H, W, Cin), jnp.float32)
    params = make_params(k_p, Cin, Cout)
    ref = residual_block_reference(x, params)
    out_f32 = jax.block_until_ready(
        residual_block_pallas(x, params, matmul_dtype=jnp.float32))
    assert out_f32.shape == (N, H, W, Cout), out_f32.shape
    assert jnp.allclose(out_f32, ref, rtol=1e-4, atol=1e-4), \
        float(jnp.max(jnp.abs(out_f32 - ref)))

    # 2) default bf16 matmul operands (f32 accumulation): looser tolerance
    out_bf16 = jax.block_until_ready(residual_block_pallas(x, params))
    assert jnp.allclose(out_bf16, ref, rtol=5e-2, atol=5e-2), \
        float(jnp.max(jnp.abs(out_bf16 - ref)))

    # 3) identity-shortcut block with a ragged batch (N not divisible by block_n)
    N2 = 5
    x_id = jax.random.normal(k_x2, (N2, H, W, Cout), jnp.float32)
    params_id = make_params(k_p2, Cout, Cout)
    ref_id = residual_block_reference(x_id, params_id)
    out_id = jax.block_until_ready(
        residual_block_pallas(x_id, params_id, matmul_dtype=jnp.float32, block_n=2))
    assert jnp.allclose(out_id, ref_id, rtol=1e-4, atol=1e-4), \
        float(jnp.max(jnp.abs(out_id - ref_id)))

    # 4) NCHW convenience wrapper matching the PyTorch module's layout
    x_nchw = jnp.transpose(x, (0, 3, 1, 2))
    out_nchw = jax.block_until_ready(
        residual_block_pallas_nchw(x_nchw, params, matmul_dtype=jnp.float32))
    assert jnp.allclose(out_nchw, jnp.transpose(ref, (0, 3, 1, 2)),
                        rtol=1e-4, atol=1e-4)

    print("KERNEL_OK")
</pallas_src>

<mosaic_0001>
module attributes {stable_mosaic.version = 11 : i64} {
  func.func @_resblock_kernel(%arg0: i32, %arg1: memref<1x16x64xf32, #tpu.memory_space<vmem>>, %arg2: memref<3x64x128xf32, #tpu.memory_space<vmem>>, %arg3: memref<3x128x128xf32, #tpu.memory_space<vmem>>, %arg4: memref<64x128xf32, #tpu.memory_space<vmem>>, %arg5: memref<1x128xf32, #tpu.memory_space<vmem>>, %arg6: memref<1x128xf32, #tpu.memory_space<vmem>>, %arg7: memref<1x16x128xf32, #tpu.memory_space<vmem>>) attributes {dimension_semantics = [#tpu.dimension_semantics<parallel>], iteration_bounds = array<i64: 2>, scalar_prefetch = 0 : i64, scratch_operands = 0 : i64, tpu.core_type = #tpu.core_type<tc>, window_params = [{transform_indices = @transform_0, window_bounds = array<i64: 1, 16, 64>}, {pipeline_mode = #tpu.pipeline_mode<synchronous>, transform_indices = @transform_1, window_bounds = array<i64: 3, 64, 128>}, {pipeline_mode = #tpu.pipeline_mode<synchronous>, transform_indices = @transform_2, window_bounds = array<i64: 3, 128, 128>}, {pipeline_mode = #tpu.pipeline_mode<synchronous>, transform_indices = @transform_3, window_bounds = array<i64: 64, 128>}, {pipeline_mode = #tpu.pipeline_mode<synchronous>, transform_indices = @transform_4, window_bounds = array<i64: 1, 128>}, {pipeline_mode = #tpu.pipeline_mode<synchronous>, transform_indices = @transform_5, window_bounds = array<i64: 1, 128>}, {transform_indices = @transform_6, window_bounds = array<i64: 1, 16, 128>}]} {
    %c0 = arith.constant 0 : index
    %c0_0 = arith.constant 0 : index
    %c0_1 = arith.constant 0 : index
    %0 = vector.load %arg1[%c0, %c0_0, %c0_1] : memref<1x16x64xf32, #tpu.memory_space<vmem>>, vector<1x16x64xf32>
    %1 = vector.shape_cast %0 : vector<1x16x64xf32> to vector<16x64xf32>
    %2 = tpu.iota {dimensions = array<i32: 0>} : vector<16x1xi32>
    %c1_i32 = arith.constant 1 : i32
    %3 = vector.broadcast %c1_i32 : i32 to vector<16x1xi32>
    %4 = arith.cmpi sge, %2, %3 : vector<16x1xi32>
    %c14_i32 = arith.constant 14 : i32
    %5 = vector.broadcast %c14_i32 : i32 to vector<16x1xi32>
    %6 = arith.cmpi sle, %2, %5 : vector<16x1xi32>
    %c0_2 = arith.constant 0 : index
    %c0_3 = arith.constant 0 : index
    %c0_4 = arith.constant 0 : index
    %7 = vector.load %arg2[%c0_2, %c0_3, %c0_4] : memref<3x64x128xf32, #tpu.memory_space<vmem>>, vector<1x64x128xf32>
    %8 = vector.shape_cast %7 : vector<1x64x128xf32> to vector<64x128xf32>
    %cst = arith.constant dense<0.000000e+00> : vector<16x128xf32>
    %9 = tpu.matmul %1, %8, %cst {dimension_numbers = #tpu.dot_dimension_numbers<[1], [0], [0], [1], [0, 0, 1, 1], [], []>} : vector<16x64xf32>, vector<64x128xf32>, vector<16x128xf32> -> vector<16x128xf32>
    %c1 = arith.constant 1 : index
    %c0_5 = arith.constant 0 : index
    %c0_6 = arith.constant 0 : index
    %10 = vector.load %arg2[%c1, %c0_5, %c0_6] : memref<3x64x128xf32, #tpu.memory_space<vmem>>, vector<1x64x128xf32>
    %11 = vector.shape_cast %10 : vector<1x64x128xf32> to vector<64x128xf32>
    %cst_7 = arith.constant dense<0.000000e+00> : vector<16x128xf32>
    %12 = tpu.matmul %1, %11, %cst_7 {dimension_numbers = #tpu.dot_dimension_numbers<[1], [0], [0], [1], [0, 0, 1, 1], [], []>} : vector<16x64xf32>, vector<64x128xf32>, vector<16x128xf32> -> vector<16x128xf32>
    %c2 = arith.constant 2 : index
    %c0_8 = arith.constant 0 : index
    %c0_9 = arith.constant 0 : index
    %13 = vector.load %arg2[%c2, %c0_8, %c0_9] : memref<3x64x128xf32, #tpu.memory_space<vmem>>, vector<1x64x128xf32>
    %14 = vector.shape_cast %13 : vector<1x64x128xf32> to vector<64x128xf32>
    %cst_10 = arith.constant dense<0.000000e+00> : vector<16x128xf32>
    %15 = tpu.matmul %1, %14, %cst_10 {dimension_numbers = #tpu.dot_dimension_numbers<[1], [0], [0], [1], [0, 0, 1, 1], [], []>} : vector<16x64xf32>, vector<64x128xf32>, vector<16x128xf32> -> vector<16x128xf32>
    %16 = vector.extract_strided_slice %9 {offsets = [15, 0], sizes = [1, 128], strides = [1, 1]} : vector<16x128xf32> to vector<1x128xf32>
    %17 = vector.extract_strided_slice %9 {offsets = [0, 0], sizes = [15, 128], strides = [1, 1]} : vector<16x128xf32> to vector<15x128xf32>
    %18 = tpu.concatenate %16, %17 in 0 : vector<1x128xf32>, vector<15x128xf32> -> vector<16x128xf32>
    %cst_11 = arith.constant 0.000000e+00 : f32
    %19 = vector.shape_cast %4 : vector<16x1xi1> to vector<16x1xi1>
    %20 = vector.broadcast %19 : vector<16x1xi1> to vector<16x128xi1>
    %21 = vector.broadcast %cst_11 : f32 to vector<16x128xf32>
    %22 = arith.select %20, %18, %21 : vector<16x128xi1>, vector<16x128xf32>
    %23 = vector.extract_strided_slice %15 {offsets = [1, 0], sizes = [15, 128], strides = [1, 1]} : vector<16x128xf32> to vector<15x128xf32>
    %24 = vector.extract_strided_slice %15 {offsets = [0, 0], sizes = [1, 128], strides = [1, 1]} : vector<16x128xf32> to vector<1x128xf32>
    %25 = tpu.concatenate %23, %24 in 0 : vector<15x128xf32>, vector<1x128xf32> -> vector<16x128xf32>
    %cst_12 = arith.constant 0.000000e+00 : f32
    %26 = vector.shape_cast %6 : vector<16x1xi1> to vector<16x1xi1>
    %27 = vector.broadcast %26 : vector<16x1xi1> to vector<16x128xi1>
    %28 = vector.broadcast %cst_12 : f32 to vector<16x128xf32>
    %29 = arith.select %27, %25, %28 : vector<16x128xi1>, vector<16x128xf32>
    %30 = arith.addf %12, %22 : vector<16x128xf32>
    %31 = arith.addf %30, %29 : vector<16x128xf32>
    %c0_13 = arith.constant 0 : index
    %c0_14 = arith.constant 0 : index
    %32 = vector.load %arg5[%c0_13, %c0_14] : memref<1x128xf32, #tpu.memory_space<vmem>>, vector<1x128xf32>
    %33 = vector.broadcast %32 : vector<1x128xf32> to vector<16x128xf32>
    %34 = arith.addf %31, %33 : vector<16x128xf32>
    %cst_15 = arith.constant 0.000000e+00 : f32
    %35 = vector.broadcast %cst_15 : f32 to vector<16x128xf32>
    %36 = arith.maximumf %34, %35 : vector<16x128xf32>
    %c0_16 = arith.constant 0 : index
    %c0_17 = arith.constant 0 : index
    %c0_18 = arith.constant 0 : index
    %37 = vector.load %arg3[%c0_16, %c0_17, %c0_18] : memref<3x128x128xf32, #tpu.memory_space<vmem>>, vector<1x128x128xf32>
    %38 = vector.shape_cast %37 : vector<1x128x128xf32> to vector<128x128xf32>
    %cst_19 = arith.constant dense<0.000000e+00> : vector<16x128xf32>
    %39 = tpu.matmul %36, %38, %cst_19 {dimension_numbers = #tpu.dot_dimension_numbers<[1], [0], [0], [1], [0, 0, 1, 1], [], []>} : vector<16x128xf32>, vector<128x128xf32>, vector<16x128xf32> -> vector<16x128xf32>
    %c1_20 = arith.constant 1 : index
    %c0_21 = arith.constant 0 : index
    %c0_22 = arith.constant 0 : index
    %40 = vector.load %arg3[%c1_20, %c0_21, %c0_22] : memref<3x128x128xf32, #tpu.memory_space<vmem>>, vector<1x128x128xf32>
    %41 = vector.shape_cast %40 : vector<1x128x128xf32> to vector<128x128xf32>
    %cst_23 = arith.constant dense<0.000000e+00> : vector<16x128xf32>
    %42 = tpu.matmul %36, %41, %cst_23 {dimension_numbers = #tpu.dot_dimension_numbers<[1], [0], [0], [1], [0, 0, 1, 1], [], []>} : vector<16x128xf32>, vector<128x128xf32>, vector<16x128xf32> -> vector<16x128xf32>
    %c2_24 = arith.constant 2 : index
    %c0_25 = arith.constant 0 : index
    %c0_26 = arith.constant 0 : index
    %43 = vector.load %arg3[%c2_24, %c0_25, %c0_26] : memref<3x128x128xf32, #tpu.memory_space<vmem>>, vector<1x128x128xf32>
    %44 = vector.shape_cast %43 : vector<1x128x128xf32> to vector<128x128xf32>
    %cst_27 = arith.constant dense<0.000000e+00> : vector<16x128xf32>
    %45 = tpu.matmul %36, %44, %cst_27 {dimension_numbers = #tpu.dot_dimension_numbers<[1], [0], [0], [1], [0, 0, 1, 1], [], []>} : vector<16x128xf32>, vector<128x128xf32>, vector<16x128xf32> -> vector<16x128xf32>
    %46 = vector.extract_strided_slice %39 {offsets = [15, 0], sizes = [1, 128], strides = [1, 1]} : vector<16x128xf32> to vector<1x128xf32>
    %47 = vector.extract_strided_slice %39 {offsets = [0, 0], sizes = [15, 128], strides = [1, 1]} : vector<16x128xf32> to vector<15x128xf32>
    %48 = tpu.concatenate %46, %47 in 0 : vector<1x128xf32>, vector<15x128xf32> -> vector<16x128xf32>
    %cst_28 = arith.constant 0.000000e+00 : f32
    %49 = vector.shape_cast %4 : vector<16x1xi1> to vector<16x1xi1>
    %50 = vector.broadcast %49 : vector<16x1xi1> to vector<16x128xi1>
    %51 = vector.broadcast %cst_28 : f32 to vector<16x128xf32>
    %52 = arith.select %50, %48, %51 : vector<16x128xi1>, vector<16x128xf32>
    %53 = vector.extract_strided_slice %45 {offsets = [1, 0], sizes = [15, 128], strides = [1, 1]} : vector<16x128xf32> to vector<15x128xf32>
    %54 = vector.extract_strided_slice %45 {offsets = [0, 0], sizes = [1, 128], strides = [1, 1]} : vector<16x128xf32> to vector<1x128xf32>
    %55 = tpu.concatenate %53, %54 in 0 : vector<15x128xf32>, vector<1x128xf32> -> vector<16x128xf32>
    %cst_29 = arith.constant 0.000000e+00 : f32
    %56 = vector.shape_cast %6 : vector<16x1xi1> to vector<16x1xi1>
    %57 = vector.broadcast %56 : vector<16x1xi1> to vector<16x128xi1>
    %58 = vector.broadcast %cst_29 : f32 to vector<16x128xf32>
    %59 = arith.select %57, %55, %58 : vector<16x128xi1>, vector<16x128xf32>
    %60 = arith.addf %42, %52 : vector<16x128xf32>
    %61 = arith.addf %60, %59 : vector<16x128xf32>
    %c0_30 = arith.constant 0 : index
    %c0_31 = arith.constant 0 : index
    %62 = vector.load %arg4[%c0_30, %c0_31] : memref<64x128xf32, #tpu.memory_space<vmem>>, vector<64x128xf32>
    %cst_32 = arith.constant dense<0.000000e+00> : vector<16x128xf32>
    %63 = tpu.matmul %1, %62, %cst_32 {dimension_numbers = #tpu.dot_dimension_numbers<[1], [0], [0], [1], [0, 0, 1, 1], [], []>} : vector<16x64xf32>, vector<64x128xf32>, vector<16x128xf32> -> vector<16x128xf32>
    %64 = arith.addf %61, %63 : vector<16x128xf32>
    %c0_33 = arith.constant 0 : index
    %c0_34 = arith.constant 0 : index
    %65 = vector.load %arg6[%c0_33, %c0_34] : memref<1x128xf32, #tpu.memory_space<vmem>>, vector<1x128xf32>
    %66 = vector.broadcast %65 : vector<1x128xf32> to vector<16x128xf32>
    %67 = arith.addf %64, %66 : vector<16x128xf32>
    %cst_35 = arith.constant 0.000000e+00 : f32
    %68 = vector.broadcast %cst_35 : f32 to vector<16x128xf32>
    %69 = arith.maximumf %67, %68 : vector<16x128xf32>
    %70 = vector.shape_cast %69 : vector<16x128xf32> to vector<1x16x128xf32>
    %c0_36 = arith.constant 0 : index
    %c0_37 = arith.constant 0 : index
    %c0_38 = arith.constant 0 : index
    %71 = vector.load %arg7[%c0_36, %c0_37, %c0_38] : memref<1x16x128xf32, #tpu.memory_space<vmem>>, vector<1x16x128xf32>
    tpu.vector_store %arg7[%c0_36, %c0_37, %c0_38], %70 {strides = array<i32>} : memref<1x16x128xf32, #tpu.memory_space<vmem>>, vector<1x16x128xf32>,
    return
  }
  func.func @transform_0(%arg0: i32) -> (i32, i32, i32) {
    %c0_i32 = arith.constant 0 : i32
    %c0_i32_0 = arith.constant 0 : i32
    %c0_i32_1 = arith.constant 0 : i32
    return %arg0, %c0_i32, %c0_i32_0 : i32, i32, i32
  }
  func.func @transform_1(%arg0: i32) -> (i32, i32, i32) {
    %c0_i32 = arith.constant 0 : i32
    %c0_i32_0 = arith.constant 0 : i32
    %c0_i32_1 = arith.constant 0 : i32
    %c0_i32_2 = arith.constant 0 : i32
    return %c0_i32, %c0_i32_0, %c0_i32_1 : i32, i32, i32
  }
  func.func @transform_2(%arg0: i32) -> (i32, i32, i32) {
    %c0_i32 = arith.constant 0 : i32
    %c0_i32_0 = arith.constant 0 : i32
    %c0_i32_1 = arith.constant 0 : i32
    %c0_i32_2 = arith.constant 0 : i32
    return %c0_i32, %c0_i32_0, %c0_i32_1 : i32, i32, i32
  }
  func.func @transform_3(%arg0: i32) -> (i32, i32) {
    %c0_i32 = arith.constant 0 : i32
    %c0_i32_0 = arith.constant 0 : i32
    %c0_i32_1 = arith.constant 0 : i32
    return %c0_i32, %c0_i32_0 : i32, i32
  }
  func.func @transform_4(%arg0: i32) -> (i32, i32) {
    %c0_i32 = arith.constant 0 : i32
    %c0_i32_0 = arith.constant 0 : i32
    %c0_i32_1 = arith.constant 0 : i32
    return %c0_i32, %c0_i32_0 : i32, i32
  }
  func.func @transform_5(%arg0: i32) -> (i32, i32) {
    %c0_i32 = arith.constant 0 : i32
    %c0_i32_0 = arith.constant 0 : i32
    %c0_i32_1 = arith.constant 0 : i32
    return %c0_i32, %c0_i32_0 : i32, i32
  }
  func.func @transform_6(%arg0: i32) -> (i32, i32, i32) {
    %c0_i32 = arith.constant 0 : i32
    %c0_i32_0 = arith.constant 0 : i32
    %c0_i32_1 = arith.constant 0 : i32
    return %arg0, %c0_i32, %c0_i32_0 : i32, i32, i32
  }
}

</mosaic_0001>

<llo_original>
// kernel: tpu_custom_call.1
$region0: #{tpu_custom_call.1}
  #allocation0 [shape = 'u32[]', space=smem, size = 0x4, offset = 0x4, fixed_abs, tag = 'smem constant byte address 0x4 - core index']
  #allocation1 [shape = 'u32[72,128]{1,0:T(1,128)}', space=vmem, size = 0x9000, scoped, tag = 'internal scratch']
  %s0 = inlined_call_operand.hbm [shape: f32[2,16,64], index: 0, kind: input, shape index: {}]
  %s1 = inlined_call_operand.hbm [shape: f32[3,64,128], index: 1, kind: input, shape index: {}]
  %s2 = inlined_call_operand.hbm [shape: f32[3,128,128], index: 2, kind: input, shape index: {}]
  %s3 = inlined_call_operand.hbm [shape: f32[64,128], index: 3, kind: input, shape index: {}]
  %s4 = inlined_call_operand.vmem [shape: f32[1,128], index: 4, kind: input, shape index: {}]
  %s5 = inlined_call_operand.vmem [shape: f32[1,128], index: 5, kind: input, shape index: {}]
  %s6 = inlined_call_operand.hbm [shape: f32[2,16,128], index: 6, kind: output, shape index: {}]
  %s7 = sld [smem:[#allocation0]]
  $region73: #{tpu_custom_call.1} parent=0
    _
  %s9 = ssub.s32 1, %s7
  %s10 = scalar_select 0, %s9, %s7
  $region1: #{tpu_custom_call.1} parent=0
    #allocation2 [shape = 'u8[16384]{0}', space=vmem, size = 0x4000, scoped, tag = 'input window, operand 0']
    #allocation3 [shape = 's32[2]{0}', space=sflag, size = 0x8, scoped, tag = 'scoped memory for tpu_custom_call.1']
    #allocation4 [shape = 's32[2]{0}', space=sflag, size = 0x8, scoped, tag = 'scoped memory for tpu_custom_call.1']
    #allocation5 [shape = 'u8[98304]{0}', space=vmem, size = 0x18000, scoped, tag = 'input window, operand 1, single buffered']
    #allocation6 [shape = 's32[1]{0}', space=sflag, size = 0x4, scoped, tag = 'scoped memory for tpu_custom_call.1']
    #allocation7 [shape = 'u8[196608]{0}', space=vmem, size = 0x30000, scoped, tag = 'input window, operand 2, single buffered']
    #allocation8 [shape = 'u8[32768]{0}', space=vmem, size = 0x8000, scoped, tag = 'input window, operand 3, single buffered']
    #allocation9 [shape = 's32[1]{0}', space=sflag, size = 0x4, scoped, tag = 'scoped memory for tpu_custom_call.1']
    #allocation10 [shape = 'u8[16384]{0}', space=vmem, size = 0x4000, scoped, tag = 'output window, operand 0']
    %11 = vsyncpa [#allocation3], 0
    %s12 = scalar_lea.sflag [#allocation3], 1
    %13 = vsyncpa %s12, 0
    %14 = vsyncpa [#allocation6], 0
    %15 = vsyncpa [#allocation9], 0
    %16 = vsyncpa [#allocation4], 0
    %s17 = scalar_lea.sflag [#allocation4], 1
    %18 = vsyncpa %s17, 0
    loop: start=0, step=1, limit=4
    $region2: #{tpu_custom_call.1} parent=1 // loop_pre_header
      _
    $region3: #{tpu_custom_call.1} parent=1 // loop_header
      %s20 = sphi 0, %s24
      %p21 = scmp.ge.s32.totalorder %s20, 4
      %s30 = sphi 0, %s32
      %s33 = sphi 0, %s30
      %s34 = sphi 0, %s33
      %s50 = sphi 0, %s34
      %s54 = sphi 0, %s54
      %s56 = sphi 0, %s54
      %s57 = sphi 0, %s56
      %s71 = sphi 0, %s57
      %s75 = sphi 0, %s75
      %s77 = sphi 0, %s75
      %s78 = sphi 0, %s77
      %s92 = sphi 0, %s78
      %s96 = sphi 0, %s96
      %s98 = sphi 0, %s96
      %s99 = sphi 0, %s98
      %s113 = sphi 0, %s99
      %s117 = sphi 0, %s117
      %s119 = sphi 0, %s117
      %s120 = sphi 0, %s119
      %s134 = sphi 0, %s120
      %s138 = sphi 0, %s138
      %s140 = sphi 0, %s138
      %s141 = sphi 0, %s140
      %s155 = sphi 0, %s141
      %s161 = sphi 0, %s163
      %s164 = sphi 0, %s161
      %s165 = sphi 0, %s164
      %s181 = sphi 0, %s165
    $region4: #{tpu_custom_call.1} parent=1 // loop_header_branch
      %23 = sbr.rel (%p21) target = $region8
    $region5: #{tpu_custom_call.1} parent=1 // loop_body
      %s25 = ssub.s32 %s20, 1
      %s26 = ssub.s32 %s20, 2
      %s27 = sadd.s32 %s20, 1
      %s28 = ssub.s32 %s20, %s27
      %p29 = scmp.eq.s32.totalorder %s28, 0
      %s31 = sadd.s32 %s30, 1
      %s32 = scalar_select %p29, %s30, %s31
      %p35 = pneg %p29
      %p36 = scmp.eq.s32.totalorder %s20, 1
      %p37 = por %p35, %p36
      %p38 = scmp.ne.s32.totalorder %s30, %s33
      %p39 = scmp.eq.s32.totalorder %s20, 0
      %p40 = por %p38, %p39
      %p41 = scmp.ne.s32.totalorder %s30, %s33
      %p42 = scmp.eq.s32.totalorder %s25, 1
      %p43 = por %p41, %p42
      %p44 = scmp.ne.s32.totalorder %s33, %s34
      %p45 = scmp.eq.s32.totalorder %s25, 0
      %p46 = por %p44, %p45
      %p47 = scmp.ne.s32.totalorder %s33, %s34
      %p48 = scmp.eq.s32.totalorder %s26, 1
      %p49 = por %p47, %p48
      %p51 = scmp.ne.s32.totalorder %s34, %s50
      %p52 = scmp.eq.s32.totalorder %s26, 0
      %p53 = por %p51, %p52
      %s55 = sadd.s32 %s54, 1
      %p58 = scmp.eq.s32.totalorder %s20, 1
      %p59 = scmp.ne.s32.totalorder %s54, %s56
      %p60 = scmp.eq.s32.totalorder %s20, 0
      %p61 = por %p59, %p60
      %p62 = scmp.ne.s32.totalorder %s54, %s56
      %p63 = scmp.eq.s32.totalorder %s25, 1
      %p64 = por %p62, %p63
      %p65 = scmp.ne.s32.totalorder %s56, %s57
      %p66 = scmp.eq.s32.totalorder %s25, 0
      %p67 = por %p65, %p66
      %p68 = scmp.ne.s32.totalorder %s56, %s57
      %p69 = scmp.eq.s32.totalorder %s26, 1
      %p70 = por %p68, %p69
      %p72 = scmp.ne.s32.totalorder %s57, %s71
      %p73 = scmp.eq.s32.totalorder %s26, 0
      %p74 = por %p72, %p73
      %s76 = sadd.s32 %s75, 1
      %p79 = scmp.eq.s32.totalorder %s20, 1
      %p80 = scmp.ne.s32.totalorder %s75, %s77
      %p81 = scmp.eq.s32.totalorder %s20, 0
      %p82 = por %p80, %p81
      %p83 = scmp.ne.s32.totalorder %s75, %s77
      %p84 = scmp.eq.s32.totalorder %s25, 1
      %p85 = por %p83, %p84
      %p86 = scmp.ne.s32.totalorder %s77, %s78
      %p87 = scmp.eq.s32.totalorder %s25, 0
      %p88 = por %p86, %p87
      %p89 = scmp.ne.s32.totalorder %s77, %s78
      %p90 = scmp.eq.s32.totalorder %s26, 1
      %p91 = por %p89, %p90
      %p93 = scmp.ne.s32.totalorder %s78, %s92
      %p94 = scmp.eq.s32.totalorder %s26, 0
      %p95 = por %p93, %p94
      %s97 = sadd.s32 %s96, 1
      %p100 = scmp.eq.s32.totalorder %s20, 1
      %p101 = scmp.ne.s32.totalorder %s96, %s98
      %p102 = scmp.eq.s32.totalorder %s20, 0
      %p103 = por %p101, %p102
      %p104 = scmp.ne.s32.totalorder %s96, %s98
      %p105 = scmp.eq.s32.totalorder %s25, 1
      %p106 = por %p104, %p105
      %p107 = scmp.ne.s32.totalorder %s98, %s99
      %p108 = scmp.eq.s32.totalorder %s25, 0
      %p109 = por %p107, %p108
      %p110 = scmp.ne.s32.totalorder %s98, %s99
      %p111 = scmp.eq.s32.totalorder %s26, 1
      %p112 = por %p110, %p111
      %p114 = scmp.ne.s32.totalorder %s99, %s113
      %p115 = scmp.eq.s32.totalorder %s26, 0
      %p116 = por %p114, %p115
      %s118 = sadd.s32 %s117, 1
      %p121 = scmp.eq.s32.totalorder %s20, 1
      %p122 = scmp.ne.s32.totalorder %s117, %s119
      %p123 = scmp.eq.s32.totalorder %s20, 0
      %p124 = por %p122, %p123
      %p125 = scmp.ne.s32.totalorder %s117, %s119
      %p126 = scmp.eq.s32.totalorder %s25, 1
      %p127 = por %p125, %p126
      %p128 = scmp.ne.s32.totalorder %s119, %s120
      %p129 = scmp.eq.s32.totalorder %s25, 0
      %p130 = por %p128, %p129
      %p131 = scmp.ne.s32.totalorder %s119, %s120
      %p132 = scmp.eq.s32.totalorder %s26, 1
      %p133 = por %p131, %p132
      %p135 = scmp.ne.s32.totalorder %s120, %s134
      %p136 = scmp.eq.s32.totalorder %s26, 0
      %p137 = por %p135, %p136
      %s139 = sadd.s32 %s138, 1
      %p142 = scmp.eq.s32.totalorder %s20, 1
      %p143 = scmp.ne.s32.totalorder %s138, %s140
      %p144 = scmp.eq.s32.totalorder %s20, 0
      %p145 = por %p143, %p144
      %p146 = scmp.ne.s32.totalorder %s138, %s140
      %p147 = scmp.eq.s32.totalorder %s25, 1
      %p148 = por %p146, %p147
      %p149 = scmp.ne.s32.totalorder %s140, %s141
      %p150 = scmp.eq.s32.totalorder %s25, 0
      %p151 = por %p149, %p150
      %p152 = scmp.ne.s32.totalorder %s140, %s141
      %p153 = scmp.eq.s32.totalorder %s26, 1
      %p154 = por %p152, %p153
      %p156 = scmp.ne.s32.totalorder %s141, %s155
      %p157 = scmp.eq.s32.totalorder %s26, 0
      %p158 = por %p156, %p157
      %s159 = ssub.s32 %s20, %s27
      %p160 = scmp.eq.s32.totalorder %s159, 0
      %s162 = sadd.s32 %s161, 1
      %s163 = scalar_select %p160, %s161, %s162
      %p166 = pneg %p160
      %p167 = scmp.eq.s32.totalorder %s20, 1
      %p168 = por %p166, %p167
      %p169 = scmp.ne.s32.totalorder %s161, %s164
      %p170 = scmp.eq.s32.totalorder %s20, 0
      %p171 = por %p169, %p170
      %p172 = scmp.ne.s32.totalorder %s161, %s164
      %p173 = scmp.eq.s32.totalorder %s25, 1
      %p174 = por %p172, %p173
      %p175 = scmp.ne.s32.totalorder %s164, %s165
      %p176 = scmp.eq.s32.totalorder %s25, 0
      %p177 = por %p175, %p176
      %p178 = scmp.ne.s32.totalorder %s164, %s165
      %p179 = scmp.eq.s32.totalorder %s26, 1
      %p180 = por %p178, %p179
      %p182 = scmp.ne.s32.totalorder %s165, %s181
      %p183 = scmp.eq.s32.totalorder %s26, 0
      %p184 = por %p182, %p183
      %p185 = scmp.le.s32.totalorder 1, %s20
      %p186 = scmp.lt.s32.totalorder %s20, 3
      %p187 = pnand %p185, %p186
      %p188 = pneg %p187
      // Predicated region
      $region9: #{tpu_custom_call.1} parent=5 // pred_check
        _
      $region10: #{tpu_custom_call.1} parent=5 // pred_check_branch
        %190 = sbr.rel (%p187) target = $region12
      $region11: #{tpu_custom_call.1} parent=5 // pred_region
        %s191 = ssub.s32 %s20, 1
        // Predicated region
        $region13: #{tpu_custom_call.1} parent=11 // pred_check
          %p192 = pneg %p67
        $region14: #{tpu_custom_call.1} parent=11 // pred_check_branch
          %194 = sbr.rel (%p192) target = $region16
        $region15: #{tpu_custom_call.1} parent=11 // pred_region
          %196 = vsyncadd [#allocation6], 0
          %s197 = sshll.u32 %s1, 4
          %s198 = int_to_ptr.hbm [resolvable:$true] %s197
          %s199 = sshll.u32 [#allocation5], 4
          %s200 = int_to_ptr.vmem [resolvable:$true] %s199
          %205 = dma.hbm_to_vmem [thread:$0]  %s198, 3072, %s200, [#allocation6], 128, 128, 8
        $region16: #{tpu_custom_call.1} parent=11 // pred_fallthru
          _
        // Predicated region
        $region17: #{tpu_custom_call.1} parent=11 // pred_check
          %p206 = pneg %p88
        $region18: #{tpu_custom_call.1} parent=11 // pred_check_branch
          %208 = sbr.rel (%p206) target = $region20
        $region19: #{tpu_custom_call.1} parent=11 // pred_region
          %210 = vsyncadd [#allocation6], 0
          %s211 = sshll.u32 %s2, 4
          %s212 = int_to_ptr.hbm [resolvable:$true] %s211
          %s213 = sshll.u32 [#allocation7], 4
          %s214 = int_to_ptr.vmem [resolvable:$true] %s213
          %219 = dma.hbm_to_vmem [thread:$0]  %s212, 6144, %s214, [#allocation6], 128, 128, 8
        $region20: #{tpu_custom_call.1} parent=11 // pred_fallthru
          _
        // Predicated region
        $region21: #{tpu_custom_call.1} parent=11 // pred_check
          %p220 = pneg %p109
        $region22: #{tpu_custom_call.1} parent=11 // pred_check_branch
          %222 = sbr.rel (%p220) target = $region24
        $region23: #{tpu_custom_call.1} parent=11 // pred_region
          %224 = vsyncadd [#allocation9], 0
          %s225 = sshll.u32 %s3, 4
          %s226 = int_to_ptr.hbm [resolvable:$true] %s225
          %s227 = sshll.u32 [#allocation8], 4
          %s228 = int_to_ptr.vmem [resolvable:$true] %s227
          %233 = dma.hbm_to_vmem [thread:$0]  %s226, 1024, %s228, [#allocation9], 128, 128, 8
        $region24: #{tpu_custom_call.1} parent=11 // pred_fallthru
          _
        // Predicated region
        $region25: #{tpu_custom_call.1} parent=11 // pred_check
          %p234 = pneg %p130
        $region26: #{tpu_custom_call.1} parent=11 // pred_check_branch
          %236 = sbr.rel (%p234) target = $region28
        $region27: #{tpu_custom_call.1} parent=11 // pred_region
          _
        $region28: #{tpu_custom_call.1} parent=11 // pred_fallthru
          _
        // Predicated region
        $region29: #{tpu_custom_call.1} parent=11 // pred_check
          %p237 = pneg %p151
        $region30: #{tpu_custom_call.1} parent=11 // pred_check_branch
          %239 = sbr.rel (%p237) target = $region32
        $region31: #{tpu_custom_call.1} parent=11 // pred_region
          _
        $region32: #{tpu_custom_call.1} parent=11 // pred_fallthru
          _
      $region12: #{tpu_custom_call.1} parent=5 // pred_fallthru
        _
      %p240 = scmp.lt.s32.totalorder %s20, 2
      // Predicated region
      $region33: #{tpu_custom_call.1} parent=5 // pred_check
        %p241 = pneg %p240
      $region34: #{tpu_custom_call.1} parent=5 // pred_check_branch
        %243 = sbr.rel (%p241) target = $region36
      $region35: #{tpu_custom_call.1} parent=5 // pred_region
        // Predicated region
        $region37: #{tpu_custom_call.1} parent=35 // pred_check
          %p244 = pneg %p40
        $region38: #{tpu_custom_call.1} parent=35 // pred_check_branch
          %246 = sbr.rel (%p244) target = $region40
        $region39: #{tpu_custom_call.1} parent=35 // pred_region
          %s247 = sand.u32 %s30, 1
          %s248 = scalar_lea.sflag [#allocation3], %s247
          %s249 = sand.u32 %s30, 1
          %s250 = smul.addr %s249, 16
          %s251 = scalar_lea.vmem [#allocation2], %s250
          %253 = vsyncadd %s248, 0
          %s254 = smul.addr %s20, 2
          %s255 = smul.addr %s254, 8
          %s256 = scalar_lea.hbm %s0, %s255
          %s257 = sshll.u32 %s256, 4
          %s258 = int_to_ptr.hbm [resolvable:$true] %s257
          %s259 = sshll.u32 %s251, 4
          %s260 = int_to_ptr.vmem [resolvable:$true] %s259
          %265 = dma.hbm_to_vmem [thread:$0]  %s258, 256, %s260, %s248, 128, 128, 8
        $region40: #{tpu_custom_call.1} parent=35 // pred_fallthru
          _
      $region36: #{tpu_custom_call.1} parent=5 // pred_fallthru
        _
      %p266 = scmp.le.s32.totalorder 1, %s20
      %p267 = scmp.lt.s32.totalorder %s20, 3
      %p268 = pnand %p266, %p267
      %p269 = pneg %p268
      // Predicated region
      $region41: #{tpu_custom_call.1} parent=5 // pred_check
        _
      $region42: #{tpu_custom_call.1} parent=5 // pred_check_branch
        %271 = sbr.rel (%p268) target = $region44
      $region43: #{tpu_custom_call.1} parent=5 // pred_region
        %s272 = ssub.s32 %s20, 1
        %s273 = sand.u32 %s33, 1
        %s274 = scalar_lea.sflag [#allocation3], %s273
        %s275 = sand.u32 %s33, 1
        %s276 = smul.addr %s275, 16
        %s277 = scalar_lea.vmem [#allocation2], %s276
        // Predicated region
        $region45: #{tpu_custom_call.1} parent=43 // pred_check
          %p278 = pneg %p46
        $region46: #{tpu_custom_call.1} parent=43 // pred_check_branch
          %280 = sbr.rel (%p278) target = $region48
        $region47: #{tpu_custom_call.1} parent=43 // pred_region
          %282 = dma.done %s274, 256
        $region48: #{tpu_custom_call.1} parent=43 // pred_fallthru
          _
        // Predicated region
        $region49: #{tpu_custom_call.1} parent=43 // pred_check
          %p283 = pneg %p67
        $region50: #{tpu_custom_call.1} parent=43 // pred_check_branch
          %285 = sbr.rel (%p283) target = $region52
        $region51: #{tpu_custom_call.1} parent=43 // pred_region
          %287 = dma.done [#allocation6], 3072
        $region52: #{tpu_custom_call.1} parent=43 // pred_fallthru
          _
        // Predicated region
        $region53: #{tpu_custom_call.1} parent=43 // pred_check
          %p288 = pneg %p88
        $region54: #{tpu_custom_call.1} parent=43 // pred_check_branch
          %290 = sbr.rel (%p288) target = $region56
        $region55: #{tpu_custom_call.1} parent=43 // pred_region
          %292 = dma.done [#allocation6], 6144
        $region56: #{tpu_custom_call.1} parent=43 // pred_fallthru
          _
        // Predicated region
        $region57: #{tpu_custom_call.1} parent=43 // pred_check
          %p293 = pneg %p109
        $region58: #{tpu_custom_call.1} parent=43 // pred_check_branch
          %295 = sbr.rel (%p293) target = $region60
        $region59: #{tpu_custom_call.1} parent=43 // pred_region
          %297 = dma.done [#allocation9], 1024
        $region60: #{tpu_custom_call.1} parent=43 // pred_fallthru
          _
        %s298 = sand.u32 %s33, 1
        %s299 = scalar_lea.sflag [#allocation3], %s298
        %s300 = sand.u32 %s33, 1
        %s301 = smul.addr %s300, 16
        %s302 = scalar_lea.vmem [#allocation2], %s301
        %p303 = pneg %p46
        %p304 = pneg %p43
        %p305 = pneg %p67
        %p306 = pneg %p64
        %p307 = pneg %p88
        %p308 = pneg %p85
        %p309 = pneg %p109
        %p310 = pneg %p106
        %p311 = pneg %p130
        %p312 = pneg %p127
        %p313 = pneg %p151
        %p314 = pneg %p148
        %p315 = pneg %p177
        %p316 = pneg %p174
        %s317 = sand.u32 %s164, 1
        %s318 = scalar_lea.sflag [#allocation4], %s317
        %s319 = sand.u32 %s164, 1
        %s320 = smul.addr %s319, 16
        %s321 = scalar_lea.vmem [#allocation10], %s320
        %v322 = vld [vmem:[%s277] sm:$0xff]
        %v323 = vld [vmem:[%s277 + $0x8] sm:$0xff]
        %v324 = vlaneseq
        %v325 = vshrl.u32 %v324, 7
        %v326 = vadd.s32 %v325, 8
        %vm327 = vcmp.ge.s32.totalorder %v325, 1
        %vm328 = vcmp.ge.s32.totalorder %v326, 1
        %vm329 = vcmp.le.s32.totalorder %v325, 14
        %vm330 = vcmp.le.s32.totalorder %v326, 14
        %v331 = vld [vmem:[#allocation5] sm:$0xff]
        %v332 = vld [vmem:[#allocation5 + $0x8] sm:$0xff]
        %v333 = vld [vmem:[#allocation5 + $0x10] sm:$0xff]
        %v334 = vld [vmem:[#allocation5 + $0x18] sm:$0xff]
        %v335 = vld [vmem:[#allocation5 + $0x20] sm:$0xff]
        %v336 = vld [vmem:[#allocation5 + $0x28] sm:$0xff]
        %v337 = vld [vmem:[#allocation5 + $0x30] sm:$0xff]
        %v338 = vld [vmem:[#allocation5 + $0x38] sm:$0xff]
        %vm339 = vcmask 523264
        %v341 = vsel %vm339, %v322, 0
        %v344 = vsel %vm339, %v323, 0
        %346 = vmatpush.msra.mxu0 0.0
        %347 = vmatpush.msra.mxu0 0.0
        %348 = vmatpush.msra.mxu0 0.0
        %349 = vmatpush.msra.mxu0 0.0
        %350 = vmatpush.msra.mxu0 0.0
        %351 = vmatpush.msra.mxu0 0.0
        %352 = vmatpush.msra.mxu0 0.0
        %353 = vmatpush.msra.mxu0 0.0
        %354 = vmatpush.msra.mxu0 %v338
        %355 = vmatpush.msra.mxu0 %v337
        %356 = vmatpush.msra.mxu0 %v336
        %357 = vmatpush.msra.mxu0 %v335
        %358 = vmatpush.msra.mxu0 %v334
        %359 = vmatpush.msra.mxu0 %v333
        %360 = vmatpush.msra.mxu0 %v332
        %361 = vmatpush.msra.mxu0 %v331
        %362 = vmatmul.f32.gmra.mxu0 %v341
        %v363 = vpop.f32.mrf.mxu0
        %v364 = vadd.f32 0.0, %v363
        %365 = vmatmul.f32.gmra.mxu0 %v344
        %v366 = vpop.f32.mrf.mxu0
        %v367 = vadd.f32 0.0, %v366
        %368 = vdwg.mxu0
        %s369 = scalar_lea.vmem [#allocation5], 64
        %v370 = vld [vmem:[%s369] sm:$0xff]
        %v371 = vld [vmem:[%s369 + $0x8] sm:$0xff]
        %v372 = vld [vmem:[%s369 + $0x10] sm:$0xff]
        %v373 = vld [vmem:[%s369 + $0x18] sm:$0xff]
        %v374 = vld [vmem:[%s369 + $0x20] sm:$0xff]
        %v375 = vld [vmem:[%s369 + $0x28] sm:$0xff]
        %v376 = vld [vmem:[%s369 + $0x30] sm:$0xff]
        %v377 = vld [vmem:[%s369 + $0x38] sm:$0xff]
        %s378 = scalar_lea.vmem [#allocation5], 128
        %v379 = vld [vmem:[%s378] sm:$0xff]
        %v380 = vld [vmem:[%s378 + $0x8] sm:$0xff]
        %v381 = vld [vmem:[%s378 + $0x10] sm:$0xff]
        %v382 = vld [vmem:[%s378 + $0x18] sm:$0xff]
        %v383 = vld [vmem:[%s378 + $0x20] sm:$0xff]
        %v384 = vld [vmem:[%s378 + $0x28] sm:$0xff]
        %v385 = vld [vmem:[%s378 + $0x30] sm:$0xff]
        %v386 = vld [vmem:[%s378 + $0x38] sm:$0xff]
        %387 = vmatpush.msra.mxu0 0.0
        %388 = vmatpush.msra.mxu0 0.0
        %389 = vmatpush.msra.mxu0 0.0
        %390 = vmatpush.msra.mxu0 0.0
        %391 = vmatpush.msra.mxu0 0.0
        %392 = vmatpush.msra.mxu0 0.0
        %393 = vmatpush.msra.mxu0 0.0
        %394 = vmatpush.msra.mxu0 0.0
        %395 = vmatpush.msra.mxu0 %v386
        %396 = vmatpush.msra.mxu0 %v385
        %397 = vmatpush.msra.mxu0 %v384
        %398 = vmatpush.msra.mxu0 %v383
        %399 = vmatpush.msra.mxu0 %v382
        %400 = vmatpush.msra.mxu0 %v381
        %401 = vmatpush.msra.mxu0 %v380
        %402 = vmatpush.msra.mxu0 %v379
        %403 = vmatmul.f32.gmra.mxu0 %v341
        %v404 = vpop.f32.mrf.mxu0
        %v405 = vadd.f32 0.0, %v404
        %406 = vmatmul.f32.gmra.mxu0 %v344
        %v407 = vpop.f32.mrf.mxu0
        %v408 = vadd.f32 0.0, %v407
        %409 = vdwg.mxu0
        %v411 = vrot.slane %v367, 7
        %vm414 = vcmask 1040384
        %v415 = vrot.slane %v364, 7
        %v416 = vsel %vm414, %v415, %v411
        %v419 = vsel %vm414, %v411, %v415
        %v420 = vsel %vm327, 1, 0
        %v421 = vsel %vm328, 1, 0
        %vm422 = vcmp.eq.s32.totalorder %v420, 1
        %vm423 = vcmp.eq.s32.totalorder %v421, 1
        %v424 = vsel %vm422, %v419, 0.0
        %v425 = vsel %vm423, %v416, 0.0
        %vm428 = vcmask 1046528
        %v429 = vrot.slane %v405, 1
        %v430 = vrot.slane %v408, 1
        %v431 = vsel %vm428, %v429, %v430
        %v435 = vsel %vm428, %v430, %v429
        %v436 = vsel %vm329, 1, 0
        %v437 = vsel %vm330, 1, 0
        %vm438 = vcmp.eq.s32.totalorder %v436, 1
        %vm439 = vcmp.eq.s32.totalorder %v437, 1
        %v440 = vsel %vm438, %v431, 0.0
        %v441 = vsel %vm439, %v435, 0.0
        %442 = vmatpush.msra.mxu0 0.0
        %443 = vmatpush.msra.mxu0 0.0
        %444 = vmatpush.msra.mxu0 0.0
        %445 = vmatpush.msra.mxu0 0.0
        %446 = vmatpush.msra.mxu0 0.0
        %447 = vmatpush.msra.mxu0 0.0
        %448 = vmatpush.msra.mxu0 0.0
        %449 = vmatpush.msra.mxu0 0.0
        %450 = vmatpush.msra.mxu0 %v377
        %451 = vmatpush.msra.mxu0 %v376
        %452 = vmatpush.msra.mxu0 %v375
        %453 = vmatpush.msra.mxu0 %v374
        %454 = vmatpush.msra.mxu0 %v373
        %455 = vmatpush.msra.mxu0 %v372
        %456 = vmatpush.msra.mxu0 %v371
        %457 = vmatpush.msra.mxu0 %v370
        %458 = vmatmul.f32.gmra.mxu0 %v341
        %v459 = vpop.f32.mrf.mxu0
        %v460 = vadd.f32 %v424, %v459
        %461 = vmatmul.f32.gmra.mxu0 %v344
        %v462 = vpop.f32.mrf.mxu0
        %v463 = vadd.f32 %v425, %v462
        %464 = vdwg.mxu0
        %v465 = vadd.f32 %v460, %v440
        %v466 = vadd.f32 %v463, %v441
        %v467 = vld [vmem:[%s4] sm:$0x1]
        %v469 = vperm.slane %v467, 0
        %v471 = vadd.f32 %v465, %v469
        %v472 = vadd.f32 %v466, %v469
        %v473 = vmax.f32 %v471, 0.0
        %v474 = vmax.f32 %v472, 0.0
        %v475 = vld [vmem:[#allocation7] sm:$0xff]
        %v476 = vld [vmem:[#allocation7 + $0x8] sm:$0xff]
        %v477 = vld [vmem:[#allocation7 + $0x10] sm:$0xff]
        %v478 = vld [vmem:[#allocation7 + $0x18] sm:$0xff]
        %v479 = vld [vmem:[#allocation7 + $0x20] sm:$0xff]
        %v480 = vld [vmem:[#allocation7 + $0x28] sm:$0xff]
        %v481 = vld [vmem:[#allocation7 + $0x30] sm:$0xff]
        %v482 = vld [vmem:[#allocation7 + $0x38] sm:$0xff]
        %v483 = vld [vmem:[#allocation7 + $0x40] sm:$0xff]
        %v484 = vld [vmem:[#allocation7 + $0x48] sm:$0xff]
        %v485 = vld [vmem:[#allocation7 + $0x50] sm:$0xff]
        %v486 = vld [vmem:[#allocation7 + $0x58] sm:$0xff]
        %v487 = vld [vmem:[#allocation7 + $0x60] sm:$0xff]
        %v488 = vld [vmem:[#allocation7 + $0x68] sm:$0xff]
        %v489 = vld [vmem:[#allocation7 + $0x70] sm:$0xff]
        %v490 = vld [vmem:[#allocation7 + $0x78] sm:$0xff]
        %491 = vmatpush.msra.mxu0 %v490
        %492 = vmatpush.msra.mxu0 %v489
        %493 = vmatpush.msra.mxu0 %v488
        %494 = vmatpush.msra.mxu0 %v487
        %495 = vmatpush.msra.mxu0 %v486
        %496 = vmatpush.msra.mxu0 %v485
        %497 = vmatpush.msra.mxu0 %v484
        %498 = vmatpush.msra.mxu0 %v483
        %499 = vmatpush.msra.mxu0 %v482
        %500 = vmatpush.msra.mxu0 %v481
        %501 = vmatpush.msra.mxu0 %v480
        %502 = vmatpush.msra.mxu0 %v479
        %503 = vmatpush.msra.mxu0 %v478
        %504 = vmatpush.msra.mxu0 %v477
        %505 = vmatpush.msra.mxu0 %v476
        %506 = vmatpush.msra.mxu0 %v475
        %507 = vmatmul.f32.gmra.mxu0 %v473
        %v508 = vpop.f32.mrf.mxu0
        %v509 = vadd.f32 0.0, %v508
        %510 = vmatmul.f32.gmra.mxu0 %v474
        %v511 = vpop.f32.mrf.mxu0
        %v512 = vadd.f32 0.0, %v511
        %513 = vdwg.mxu0
        %s514 = scalar_lea.vmem [#allocation7], 128
        %v515 = vld [vmem:[%s514] sm:$0xff]
        %v516 = vld [vmem:[%s514 + $0x8] sm:$0xff]
        %v517 = vld [vmem:[%s514 + $0x10] sm:$0xff]
        %v518 = vld [vmem:[%s514 + $0x18] sm:$0xff]
        %v519 = vld [vmem:[%s514 + $0x20] sm:$0xff]
        %v520 = vld [vmem:[%s514 + $0x28] sm:$0xff]
        %v521 = vld [vmem:[%s514 + $0x30] sm:$0xff]
        %v522 = vld [vmem:[%s514 + $0x38] sm:$0xff]
        %v523 = vld [vmem:[%s514 + $0x40] sm:$0xff]
        %v524 = vld [vmem:[%s514 + $0x48] sm:$0xff]
        %v525 = vld [vmem:[%s514 + $0x50] sm:$0xff]
        %v526 = vld [vmem:[%s514 + $0x58] sm:$0xff]
        %v527 = vld [vmem:[%s514 + $0x60] sm:$0xff]
        %v528 = vld [vmem:[%s514 + $0x68] sm:$0xff]
        %v529 = vld [vmem:[%s514 + $0x70] sm:$0xff]
        %v530 = vld [vmem:[%s514 + $0x78] sm:$0xff]
        %s531 = scalar_lea.vmem [#allocation7], 256
        %v532 = vld [vmem:[%s531] sm:$0xff]
        %v533 = vld [vmem:[%s531 + $0x8] sm:$0xff]
        %v534 = vld [vmem:[%s531 + $0x10] sm:$0xff]
        %v535 = vld [vmem:[%s531 + $0x18] sm:$0xff]
        %v536 = vld [vmem:[%s531 + $0x20] sm:$0xff]
        %v537 = vld [vmem:[%s531 + $0x28] sm:$0xff]
        %v538 = vld [vmem:[%s531 + $0x30] sm:$0xff]
        %v539 = vld [vmem:[%s531 + $0x38] sm:$0xff]
        %v540 = vld [vmem:[%s531 + $0x40] sm:$0xff]
        %v541 = vld [vmem:[%s531 + $0x48] sm:$0xff]
        %v542 = vld [vmem:[%s531 + $0x50] sm:$0xff]
        %v543 = vld [vmem:[%s531 + $0x58] sm:$0xff]
        %v544 = vld [vmem:[%s531 + $0x60] sm:$0xff]
        %v545 = vld [vmem:[%s531 + $0x68] sm:$0xff]
        %v546 = vld [vmem:[%s531 + $0x70] sm:$0xff]
        %v547 = vld [vmem:[%s531 + $0x78] sm:$0xff]
        %548 = vmatpush.msra.mxu0 %v547
        %549 = vmatpush.msra.mxu0 %v546
        %550 = vmatpush.msra.mxu0 %v545
        %551 = vmatpush.msra.mxu0 %v544
        %552 = vmatpush.msra.mxu0 %v543
        %553 = vmatpush.msra.mxu0 %v542
        %554 = vmatpush.msra.mxu0 %v541
        %555 = vmatpush.msra.mxu0 %v540
        %556 = vmatpush.msra.mxu0 %v539
        %557 = vmatpush.msra.mxu0 %v538
        %558 = vmatpush.msra.mxu0 %v537
        %559 = vmatpush.msra.mxu0 %v536
        %560 = vmatpush.msra.mxu0 %v535
        %561 = vmatpush.msra.mxu0 %v534
        %562 = vmatpush.msra.mxu0 %v533
        %563 = vmatpush.msra.mxu0 %v532
        %564 = vmatmul.f32.gmra.mxu0 %v473
        %v565 = vpop.f32.mrf.mxu0
        %v566 = vadd.f32 0.0, %v565
        %567 = vmatmul.f32.gmra.mxu0 %v474
        %v568 = vpop.f32.mrf.mxu0
        %v569 = vadd.f32 0.0, %v568
        %570 = vdwg.mxu0
        %v572 = vrot.slane %v512, 7
        %v575 = vrot.slane %v509, 7
        %v576 = vsel %vm414, %v575, %v572
        %v579 = vsel %vm414, %v572, %v575
        %v580 = vsel %vm422, %v579, 0.0
        %v581 = vsel %vm423, %v576, 0.0
        %v584 = vrot.slane %v566, 1
        %v585 = vrot.slane %v569, 1
        %v586 = vsel %vm428, %v584, %v585
        %v590 = vsel %vm428, %v585, %v584
        %v591 = vsel %vm438, %v586, 0.0
        %v592 = vsel %vm439, %v590, 0.0
        %593 = vmatpush.msra.mxu0 %v530
        %594 = vmatpush.msra.mxu0 %v529
        %595 = vmatpush.msra.mxu0 %v528
        %596 = vmatpush.msra.mxu0 %v527
        %597 = vmatpush.msra.mxu0 %v526
        %598 = vmatpush.msra.mxu0 %v525
        %599 = vmatpush.msra.mxu0 %v524
        %600 = vmatpush.msra.mxu0 %v523
        %601 = vmatpush.msra.mxu0 %v522
        %602 = vmatpush.msra.mxu0 %v521
        %603 = vmatpush.msra.mxu0 %v520
        %604 = vmatpush.msra.mxu0 %v519
        %605 = vmatpush.msra.mxu0 %v518
        %606 = vmatpush.msra.mxu0 %v517
        %607 = vmatpush.msra.mxu0 %v516
        %608 = vmatpush.msra.mxu0 %v515
        %609 = vmatmul.f32.gmra.mxu0 %v473
        %v610 = vpop.f32.mrf.mxu0
        %v611 = vadd.f32 %v580, %v610
        %612 = vmatmul.f32.gmra.mxu0 %v474
        %v613 = vpop.f32.mrf.mxu0
        %v614 = vadd.f32 %v581, %v613
        %615 = vdwg.mxu0
        %v616 = vadd.f32 %v611, %v591
        %v617 = vadd.f32 %v614, %v592
        %v618 = vld [vmem:[#allocation8] sm:$0xff]
        %v619 = vld [vmem:[#allocation8 + $0x8] sm:$0xff]
        %v620 = vld [vmem:[#allocation8 + $0x10] sm:$0xff]
        %v621 = vld [vmem:[#allocation8 + $0x18] sm:$0xff]
        %v622 = vld [vmem:[#allocation8 + $0x20] sm:$0xff]
        %v623 = vld [vmem:[#allocation8 + $0x28] sm:$0xff]
        %v624 = vld [vmem:[#allocation8 + $0x30] sm:$0xff]
        %v625 = vld [vmem:[#allocation8 + $0x38] sm:$0xff]
        %626 = vmatpush.msra.mxu0 0.0
        %627 = vmatpush.msra.mxu0 0.0
        %628 = vmatpush.msra.mxu0 0.0
        %629 = vmatpush.msra.mxu0 0.0
        %630 = vmatpush.msra.mxu0 0.0
        %631 = vmatpush.msra.mxu0 0.0
        %632 = vmatpush.msra.mxu0 0.0
        %633 = vmatpush.msra.mxu0 0.0
        %634 = vmatpush.msra.mxu0 %v625
        %635 = vmatpush.msra.mxu0 %v624
        %636 = vmatpush.msra.mxu0 %v623
        %637 = vmatpush.msra.mxu0 %v622
        %638 = vmatpush.msra.mxu0 %v621
        %639 = vmatpush.msra.mxu0 %v620
        %640 = vmatpush.msra.mxu0 %v619
        %641 = vmatpush.msra.mxu0 %v618
        %642 = vmatmul.f32.gmra.mxu0 %v341
        %v643 = vpop.f32.mrf.mxu0
        %v644 = vadd.f32 0.0, %v643
        %645 = vmatmul.f32.gmra.mxu0 %v344
        %v646 = vpop.f32.mrf.mxu0
        %v647 = vadd.f32 0.0, %v646
        %648 = vdwg.mxu0
        %v649 = vadd.f32 %v616, %v644
        %v650 = vadd.f32 %v617, %v647
        %v651 = vld [vmem:[%s5] sm:$0x1]
        %v653 = vperm.slane %v651, 0
        %v655 = vadd.f32 %v649, %v653
        %v656 = vadd.f32 %v650, %v653
        %v657 = vmax.f32 %v655, 0.0
        %v658 = vmax.f32 %v656, 0.0
        %659 = vst [vmem:[%s321] sm:$0xff] %v657
        %660 = vst [vmem:[%s321 + $0x8] sm:$0xff] %v658
        %s661 = sand.u32 %s164, 1
        %s662 = scalar_lea.sflag [#allocation4], %s661
        %s663 = sand.u32 %s164, 1
        %s664 = smul.addr %s663, 16
        %s665 = scalar_lea.vmem [#allocation10], %s664
        // Predicated region
        $region61: #{tpu_custom_call.1} parent=43 // pred_check
          %p666 = pneg %p174
        $region62: #{tpu_custom_call.1} parent=43 // pred_check_branch
          %668 = sbr.rel (%p666) target = $region64
        $region63: #{tpu_custom_call.1} parent=43 // pred_region
          %670 = vsyncadd %s662, 0
          %s671 = smul.addr %s25, 2
          %s672 = smul.addr %s671, 8
          %s673 = scalar_lea.hbm %s6, %s672
          %s674 = sshll.u32 %s665, 4
          %s675 = int_to_ptr.vmem [resolvable:$true] %s674
          %s676 = sshll.u32 %s673, 4
          %s677 = int_to_ptr.hbm [resolvable:$true] %s676
          %682 = dma.vmem_to_hbm [thread:$0]  %s675, 256, %s677, %s662, 128, 128, 8
        $region64: #{tpu_custom_call.1} parent=43 // pred_fallthru
          _
      $region44: #{tpu_custom_call.1} parent=5 // pred_fallthru
        _
      %p683 = scmp.le.s32.totalorder 2, %s20
      // Predicated region
      $region65: #{tpu_custom_call.1} parent=5 // pred_check
        %p684 = pneg %p683
      $region66: #{tpu_custom_call.1} parent=5 // pred_check_branch
        %686 = sbr.rel (%p684) target = $region68
      $region67: #{tpu_custom_call.1} parent=5 // pred_region
        %s687 = ssub.s32 %s20, 2
        // Predicated region
        $region69: #{tpu_custom_call.1} parent=67 // pred_check
          %p688 = pneg %p180
        $region70: #{tpu_custom_call.1} parent=67 // pred_check_branch
          %690 = sbr.rel (%p688) target = $region72
        $region71: #{tpu_custom_call.1} parent=67 // pred_region
          %s691 = sand.u32 %s165, 1
          %s692 = scalar_lea.sflag [#allocation4], %s691
          %s693 = sand.u32 %s165, 1
          %s694 = smul.addr %s693, 16
          %s695 = scalar_lea.vmem [#allocation10], %s694
          %697 = dma.done %s692, 256
        $region72: #{tpu_custom_call.1} parent=67 // pred_fallthru
          _
      $region68: #{tpu_custom_call.1} parent=5 // pred_fallthru
        _
    $region6: #{tpu_custom_call.1} parent=1 // loop_footer
      %s24 = sadd.s32 1, %s20
    $region7: #{tpu_custom_call.1} parent=1 // loop_footer_branch
      %19 = sbr.rel target = $region3
    $region8: #{tpu_custom_call.1} parent=1 // loop_exit
      _
    %698 = vsyncpa [#allocation3], 1
    %s699 = scalar_lea.sflag [#allocation3], 1
    %700 = vsyncpa %s699, 1
    %701 = vsyncpa [#allocation6], 1
    %702 = vsyncpa [#allocation9], 1
    %703 = vsyncpa [#allocation4], 1
    %s704 = scalar_lea.sflag [#allocation4], 1
    %705 = vsyncpa %s704, 1

</llo_original>
